<compile_context>
chip_gen: v5e
topology: v5e:2x2
jax: 0.10.0
libtpu: 0.0.40
codegen_flags: <defaults>
</compile_context>

<pallas_src>
import jax
import jax.numpy as jnp
from jax.experimental import pallas as pl
from jax.experimental.pallas import tpu as pltpu

_DIMS = [784, 32, 32, 32, 32, 32, 32, 32, 10]


def _mlp_kernel(x_ref,
                w1, b1, w2, b2, w3, b3, w4, b4,
                w5, b5, w6, b6, w7, b7, w8, b8,
                out_ref):
    """Fused forward: 7 x (Linear + ReLU), Linear, log_softmax over axis 1.

    Matmul operands are bf16 (MXU, fp32 accumulate); everything elementwise
    (bias add, ReLU, log_softmax) stays fp32.
    """

    def linear(h, w_ref, b_ref):
        return (jnp.dot(h.astype(jnp.bfloat16), w_ref[...],
                        preferred_element_type=jnp.float32)
                + b_ref[...])

    h = x_ref[...]                                   # [TB, 784] bf16
    h = jnp.maximum(linear(h, w1, b1), 0.0)
    h = jnp.maximum(linear(h, w2, b2), 0.0)
    h = jnp.maximum(linear(h, w3, b3), 0.0)
    h = jnp.maximum(linear(h, w4, b4), 0.0)
    h = jnp.maximum(linear(h, w5, b5), 0.0)
    h = jnp.maximum(linear(h, w6, b6), 0.0)
    h = jnp.maximum(linear(h, w7, b7), 0.0)
    logits = linear(h, w8, b8)                       # [TB, 10] fp32

    # log_softmax along axis 1 (numerically stable, fp32)
    m = jnp.max(logits, axis=1, keepdims=True)
    shifted = logits - m
    lse = jnp.log(jnp.sum(jnp.exp(shifted), axis=1, keepdims=True))
    out_ref[...] = shifted - lse


def mlp_forward(x, params, *, tb=1024):
    """x: [B, 784] float32. params: list of (W [in,out] fp32, b [out] fp32)."""
    B, F = x.shape
    n_out = params[-1][0].shape[1]

    # Batch tile: multiple of 8 sublanes, capped at `tb` (kept well under the
    # 64 MiB v7x VMEM: 1024x784 bf16 tile = ~1.6 MiB, double-buffered ~3.2 MiB).
    tb = min(tb, max(8, -(-B // 8) * 8))
    b_pad = -(-B // tb) * tb

    x_bf16 = x.astype(jnp.bfloat16)
    if b_pad != B:
        x_bf16 = jnp.pad(x_bf16, ((0, b_pad - B), (0, 0)))

    flat_params = []
    in_specs = [pl.BlockSpec((tb, F), lambda i: (i, 0))]
    for (w, b) in params:
        w_bf16 = w.astype(jnp.bfloat16)
        b2d = b.reshape(1, -1).astype(jnp.float32)   # keep everything 2-D
        flat_params += [w_bf16, b2d]
        in_specs += [pl.BlockSpec(w_bf16.shape, lambda i: (0, 0)),
                     pl.BlockSpec(b2d.shape, lambda i: (0, 0))]

    flops = 2 * b_pad * sum(_DIMS[i] * _DIMS[i + 1] for i in range(len(_DIMS) - 1))
    bytes_accessed = (b_pad * F * 2                                  # bf16 X stream
                      + sum(w.size * 2 + b.size * 4 for w, b in params)
                      + b_pad * n_out * 4)                           # fp32 output
    cost = pl.CostEstimate(flops=flops,
                           transcendentals=b_pad * n_out,
                           bytes_accessed=bytes_accessed)

    out = pl.pallas_call(
        _mlp_kernel,
        out_shape=jax.ShapeDtypeStruct((b_pad, n_out), jnp.float32),
        grid=(b_pad // tb,),
        in_specs=in_specs,
        out_specs=pl.BlockSpec((tb, n_out), lambda i: (i, 0)),
        compiler_params=pltpu.CompilerParams(
            dimension_semantics=("parallel",)),
        cost_estimate=cost,
    )(x_bf16, *flat_params)

    return out[:B] if b_pad != B else out


def init_params(key):
    """Deterministic init matching the torch module's layer shapes."""
    params = []
    for i in range(len(_DIMS) - 1):
        fan_in, fan_out = _DIMS[i], _DIMS[i + 1]
        key, kw, kb = jax.random.split(key, 3)
        bound = 1.0 / (fan_in ** 0.5)                # torch nn.Linear default range
        w = jax.random.uniform(kw, (fan_in, fan_out), jnp.float32,
                               minval=-bound, maxval=bound)
        b = jax.random.uniform(kb, (fan_out,), jnp.float32,
                               minval=-bound, maxval=bound)
        params.append((w, b))
    return params


def reference_forward(x, params):
    """Plain-JAX reference with the same bf16-matmul / fp32-accumulate recipe."""
    h = x.astype(jnp.bfloat16)
    for (w, b) in params[:-1]:
        y = jnp.dot(h, w.astype(jnp.bfloat16),
                    preferred_element_type=jnp.float32) + b
        h = jnp.maximum(y, 0.0).astype(jnp.bfloat16)
    w, b = params[-1]
    logits = jnp.dot(h, w.astype(jnp.bfloat16),
                     preferred_element_type=jnp.float32) + b
    return jax.nn.log_softmax(logits, axis=1)


if __name__ == "__main__":
    key = jax.random.PRNGKey(0)
    key, kx = jax.random.split(key)

    B = 8
    x = jax.random.normal(kx, (B, 784), dtype=jnp.float32)
    params = init_params(key)

    out = mlp_forward(x, params)
    jax.block_until_ready(out)

    ref = reference_forward(x, params)
    assert out.shape == (B, 10)
    assert jnp.allclose(out, ref, atol=2e-2, rtol=2e-2), "mismatch vs reference"

    print("KERNEL_OK")
</pallas_src>

<mosaic_0001>
module attributes {stable_mosaic.version = 11 : i64} {
  func.func @_mlp_kernel(%arg0: i32, %arg1: memref<8x784xbf16, #tpu.memory_space<vmem>>, %arg2: memref<784x32xbf16, #tpu.memory_space<vmem>>, %arg3: memref<1x32xf32, #tpu.memory_space<vmem>>, %arg4: memref<32x32xbf16, #tpu.memory_space<vmem>>, %arg5: memref<1x32xf32, #tpu.memory_space<vmem>>, %arg6: memref<32x32xbf16, #tpu.memory_space<vmem>>, %arg7: memref<1x32xf32, #tpu.memory_space<vmem>>, %arg8: memref<32x32xbf16, #tpu.memory_space<vmem>>, %arg9: memref<1x32xf32, #tpu.memory_space<vmem>>, %arg10: memref<32x32xbf16, #tpu.memory_space<vmem>>, %arg11: memref<1x32xf32, #tpu.memory_space<vmem>>, %arg12: memref<32x32xbf16, #tpu.memory_space<vmem>>, %arg13: memref<1x32xf32, #tpu.memory_space<vmem>>, %arg14: memref<32x32xbf16, #tpu.memory_space<vmem>>, %arg15: memref<1x32xf32, #tpu.memory_space<vmem>>, %arg16: memref<32x10xbf16, #tpu.memory_space<vmem>>, %arg17: memref<1x10xf32, #tpu.memory_space<vmem>>, %arg18: memref<8x10xf32, #tpu.memory_space<vmem>>) attributes {dimension_semantics = [#tpu.dimension_semantics<parallel>], iteration_bounds = array<i64: 1>, scalar_prefetch = 0 : i64, scratch_operands = 0 : i64, tpu.core_type = #tpu.core_type<tc>, window_params = [{transform_indices = @transform_0, window_bounds = array<i64: 8, 784>}, {pipeline_mode = #tpu.pipeline_mode<synchronous>, transform_indices = @transform_1, window_bounds = array<i64: 784, 32>}, {pipeline_mode = #tpu.pipeline_mode<synchronous>, transform_indices = @transform_2, window_bounds = array<i64: 1, 32>}, {pipeline_mode = #tpu.pipeline_mode<synchronous>, transform_indices = @transform_3, window_bounds = array<i64: 32, 32>}, {pipeline_mode = #tpu.pipeline_mode<synchronous>, transform_indices = @transform_4, window_bounds = array<i64: 1, 32>}, {pipeline_mode = #tpu.pipeline_mode<synchronous>, transform_indices = @transform_5, window_bounds = array<i64: 32, 32>}, {pipeline_mode = #tpu.pipeline_mode<synchronous>, transform_indices = @transform_6, window_bounds = array<i64: 1, 32>}, {pipeline_mode = #tpu.pipeline_mode<synchronous>, transform_indices = @transform_7, window_bounds = array<i64: 32, 32>}, {pipeline_mode = #tpu.pipeline_mode<synchronous>, transform_indices = @transform_8, window_bounds = array<i64: 1, 32>}, {pipeline_mode = #tpu.pipeline_mode<synchronous>, transform_indices = @transform_9, window_bounds = array<i64: 32, 32>}, {pipeline_mode = #tpu.pipeline_mode<synchronous>, transform_indices = @transform_10, window_bounds = array<i64: 1, 32>}, {pipeline_mode = #tpu.pipeline_mode<synchronous>, transform_indices = @transform_11, window_bounds = array<i64: 32, 32>}, {pipeline_mode = #tpu.pipeline_mode<synchronous>, transform_indices = @transform_12, window_bounds = array<i64: 1, 32>}, {pipeline_mode = #tpu.pipeline_mode<synchronous>, transform_indices = @transform_13, window_bounds = array<i64: 32, 32>}, {pipeline_mode = #tpu.pipeline_mode<synchronous>, transform_indices = @transform_14, window_bounds = array<i64: 1, 32>}, {pipeline_mode = #tpu.pipeline_mode<synchronous>, transform_indices = @transform_15, window_bounds = array<i64: 32, 10>}, {pipeline_mode = #tpu.pipeline_mode<synchronous>, transform_indices = @transform_16, window_bounds = array<i64: 1, 10>}, {transform_indices = @transform_17, window_bounds = array<i64: 8, 10>}]} {
    %c0 = arith.constant 0 : index
    %c0_0 = arith.constant 0 : index
    %0 = vector.load %arg1[%c0, %c0_0] : memref<8x784xbf16, #tpu.memory_space<vmem>>, vector<8x784xbf16>
    %c0_1 = arith.constant 0 : index
    %c0_2 = arith.constant 0 : index
    %1 = vector.load %arg2[%c0_1, %c0_2] : memref<784x32xbf16, #tpu.memory_space<vmem>>, vector<784x32xbf16>
    %cst = arith.constant dense<0.000000e+00> : vector<8x32xf32>
    %2 = tpu.matmul %0, %1, %cst {dimension_numbers = #tpu.dot_dimension_numbers<[1], [0], [0], [1], [0, 0, 1, 1], [], []>} : vector<8x784xbf16>, vector<784x32xbf16>, vector<8x32xf32> -> vector<8x32xf32>
    %c0_3 = arith.constant 0 : index
    %c0_4 = arith.constant 0 : index
    %3 = vector.load %arg3[%c0_3, %c0_4] : memref<1x32xf32, #tpu.memory_space<vmem>>, vector<1x32xf32>
    %4 = vector.broadcast %3 : vector<1x32xf32> to vector<8x32xf32>
    %5 = arith.addf %2, %4 : vector<8x32xf32>
    %cst_5 = arith.constant 0.000000e+00 : f32
    %6 = vector.broadcast %cst_5 : f32 to vector<8x32xf32>
    %7 = arith.maximumf %5, %6 : vector<8x32xf32>
    %8 = arith.truncf %7 : vector<8x32xf32> to vector<8x32xbf16>
    %c0_6 = arith.constant 0 : index
    %c0_7 = arith.constant 0 : index
    %9 = vector.load %arg4[%c0_6, %c0_7] : memref<32x32xbf16, #tpu.memory_space<vmem>>, vector<32x32xbf16>
    %cst_8 = arith.constant dense<0.000000e+00> : vector<8x32xf32>
    %10 = tpu.matmul %8, %9, %cst_8 {dimension_numbers = #tpu.dot_dimension_numbers<[1], [0], [0], [1], [0, 0, 1, 1], [], []>} : vector<8x32xbf16>, vector<32x32xbf16>, vector<8x32xf32> -> vector<8x32xf32>
    %c0_9 = arith.constant 0 : index
    %c0_10 = arith.constant 0 : index
    %11 = vector.load %arg5[%c0_9, %c0_10] : memref<1x32xf32, #tpu.memory_space<vmem>>, vector<1x32xf32>
    %12 = vector.broadcast %11 : vector<1x32xf32> to vector<8x32xf32>
    %13 = arith.addf %10, %12 : vector<8x32xf32>
    %cst_11 = arith.constant 0.000000e+00 : f32
    %14 = vector.broadcast %cst_11 : f32 to vector<8x32xf32>
    %15 = arith.maximumf %13, %14 : vector<8x32xf32>
    %16 = arith.truncf %15 : vector<8x32xf32> to vector<8x32xbf16>
    %c0_12 = arith.constant 0 : index
    %c0_13 = arith.constant 0 : index
    %17 = vector.load %arg6[%c0_12, %c0_13] : memref<32x32xbf16, #tpu.memory_space<vmem>>, vector<32x32xbf16>
    %cst_14 = arith.constant dense<0.000000e+00> : vector<8x32xf32>
    %18 = tpu.matmul %16, %17, %cst_14 {dimension_numbers = #tpu.dot_dimension_numbers<[1], [0], [0], [1], [0, 0, 1, 1], [], []>} : vector<8x32xbf16>, vector<32x32xbf16>, vector<8x32xf32> -> vector<8x32xf32>
    %c0_15 = arith.constant 0 : index
    %c0_16 = arith.constant 0 : index
    %19 = vector.load %arg7[%c0_15, %c0_16] : memref<1x32xf32, #tpu.memory_space<vmem>>, vector<1x32xf32>
    %20 = vector.broadcast %19 : vector<1x32xf32> to vector<8x32xf32>
    %21 = arith.addf %18, %20 : vector<8x32xf32>
    %cst_17 = arith.constant 0.000000e+00 : f32
    %22 = vector.broadcast %cst_17 : f32 to vector<8x32xf32>
    %23 = arith.maximumf %21, %22 : vector<8x32xf32>
    %24 = arith.truncf %23 : vector<8x32xf32> to vector<8x32xbf16>
    %c0_18 = arith.constant 0 : index
    %c0_19 = arith.constant 0 : index
    %25 = vector.load %arg8[%c0_18, %c0_19] : memref<32x32xbf16, #tpu.memory_space<vmem>>, vector<32x32xbf16>
    %cst_20 = arith.constant dense<0.000000e+00> : vector<8x32xf32>
    %26 = tpu.matmul %24, %25, %cst_20 {dimension_numbers = #tpu.dot_dimension_numbers<[1], [0], [0], [1], [0, 0, 1, 1], [], []>} : vector<8x32xbf16>, vector<32x32xbf16>, vector<8x32xf32> -> vector<8x32xf32>
    %c0_21 = arith.constant 0 : index
    %c0_22 = arith.constant 0 : index
    %27 = vector.load %arg9[%c0_21, %c0_22] : memref<1x32xf32, #tpu.memory_space<vmem>>, vector<1x32xf32>
    %28 = vector.broadcast %27 : vector<1x32xf32> to vector<8x32xf32>
    %29 = arith.addf %26, %28 : vector<8x32xf32>
    %cst_23 = arith.constant 0.000000e+00 : f32
    %30 = vector.broadcast %cst_23 : f32 to vector<8x32xf32>
    %31 = arith.maximumf %29, %30 : vector<8x32xf32>
    %32 = arith.truncf %31 : vector<8x32xf32> to vector<8x32xbf16>
    %c0_24 = arith.constant 0 : index
    %c0_25 = arith.constant 0 : index
    %33 = vector.load %arg10[%c0_24, %c0_25] : memref<32x32xbf16, #tpu.memory_space<vmem>>, vector<32x32xbf16>
    %cst_26 = arith.constant dense<0.000000e+00> : vector<8x32xf32>
    %34 = tpu.matmul %32, %33, %cst_26 {dimension_numbers = #tpu.dot_dimension_numbers<[1], [0], [0], [1], [0, 0, 1, 1], [], []>} : vector<8x32xbf16>, vector<32x32xbf16>, vector<8x32xf32> -> vector<8x32xf32>
    %c0_27 = arith.constant 0 : index
    %c0_28 = arith.constant 0 : index
    %35 = vector.load %arg11[%c0_27, %c0_28] : memref<1x32xf32, #tpu.memory_space<vmem>>, vector<1x32xf32>
    %36 = vector.broadcast %35 : vector<1x32xf32> to vector<8x32xf32>
    %37 = arith.addf %34, %36 : vector<8x32xf32>
    %cst_29 = arith.constant 0.000000e+00 : f32
    %38 = vector.broadcast %cst_29 : f32 to vector<8x32xf32>
    %39 = arith.maximumf %37, %38 : vector<8x32xf32>
    %40 = arith.truncf %39 : vector<8x32xf32> to vector<8x32xbf16>
    %c0_30 = arith.constant 0 : index
    %c0_31 = arith.constant 0 : index
    %41 = vector.load %arg12[%c0_30, %c0_31] : memref<32x32xbf16, #tpu.memory_space<vmem>>, vector<32x32xbf16>
    %cst_32 = arith.constant dense<0.000000e+00> : vector<8x32xf32>
    %42 = tpu.matmul %40, %41, %cst_32 {dimension_numbers = #tpu.dot_dimension_numbers<[1], [0], [0], [1], [0, 0, 1, 1], [], []>} : vector<8x32xbf16>, vector<32x32xbf16>, vector<8x32xf32> -> vector<8x32xf32>
    %c0_33 = arith.constant 0 : index
    %c0_34 = arith.constant 0 : index
    %43 = vector.load %arg13[%c0_33, %c0_34] : memref<1x32xf32, #tpu.memory_space<vmem>>, vector<1x32xf32>
    %44 = vector.broadcast %43 : vector<1x32xf32> to vector<8x32xf32>
    %45 = arith.addf %42, %44 : vector<8x32xf32>
    %cst_35 = arith.constant 0.000000e+00 : f32
    %46 = vector.broadcast %cst_35 : f32 to vector<8x32xf32>
    %47 = arith.maximumf %45, %46 : vector<8x32xf32>
    %48 = arith.truncf %47 : vector<8x32xf32> to vector<8x32xbf16>
    %c0_36 = arith.constant 0 : index
    %c0_37 = arith.constant 0 : index
    %49 = vector.load %arg14[%c0_36, %c0_37] : memref<32x32xbf16, #tpu.memory_space<vmem>>, vector<32x32xbf16>
    %cst_38 = arith.constant dense<0.000000e+00> : vector<8x32xf32>
    %50 = tpu.matmul %48, %49, %cst_38 {dimension_numbers = #tpu.dot_dimension_numbers<[1], [0], [0], [1], [0, 0, 1, 1], [], []>} : vector<8x32xbf16>, vector<32x32xbf16>, vector<8x32xf32> -> vector<8x32xf32>
    %c0_39 = arith.constant 0 : index
    %c0_40 = arith.constant 0 : index
    %51 = vector.load %arg15[%c0_39, %c0_40] : memref<1x32xf32, #tpu.memory_space<vmem>>, vector<1x32xf32>
    %52 = vector.broadcast %51 : vector<1x32xf32> to vector<8x32xf32>
    %53 = arith.addf %50, %52 : vector<8x32xf32>
    %cst_41 = arith.constant 0.000000e+00 : f32
    %54 = vector.broadcast %cst_41 : f32 to vector<8x32xf32>
    %55 = arith.maximumf %53, %54 : vector<8x32xf32>
    %56 = arith.truncf %55 : vector<8x32xf32> to vector<8x32xbf16>
    %c0_42 = arith.constant 0 : index
    %c0_43 = arith.constant 0 : index
    %57 = vector.load %arg16[%c0_42, %c0_43] : memref<32x10xbf16, #tpu.memory_space<vmem>>, vector<32x10xbf16>
    %cst_44 = arith.constant dense<0.000000e+00> : vector<8x10xf32>
    %58 = tpu.matmul %56, %57, %cst_44 {dimension_numbers = #tpu.dot_dimension_numbers<[1], [0], [0], [1], [0, 0, 1, 1], [], []>} : vector<8x32xbf16>, vector<32x10xbf16>, vector<8x10xf32> -> vector<8x10xf32>
    %c0_45 = arith.constant 0 : index
    %c0_46 = arith.constant 0 : index
    %59 = vector.load %arg17[%c0_45, %c0_46] : memref<1x10xf32, #tpu.memory_space<vmem>>, vector<1x10xf32>
    %60 = vector.broadcast %59 : vector<1x10xf32> to vector<8x10xf32>
    %61 = arith.addf %58, %60 : vector<8x10xf32>
    %cst_47 = arith.constant dense<0xFF800000> : vector<8xf32>
    %62 = vector.multi_reduction <maximumf>, %61, %cst_47 [1] : vector<8x10xf32> to vector<8xf32>
    %63 = vector.shape_cast %62 : vector<8xf32> to vector<8x1xf32>
    %64 = vector.broadcast %63 : vector<8x1xf32> to vector<8x10xf32>
    %65 = arith.subf %61, %64 : vector<8x10xf32>
    %66 = math.exp %65 : vector<8x10xf32>
    %cst_48 = arith.constant dense<0.000000e+00> : vector<8xf32>
    %67 = vector.multi_reduction <add>, %66, %cst_48 [1] : vector<8x10xf32> to vector<8xf32>
    %68 = vector.shape_cast %67 : vector<8xf32> to vector<8x1xf32>
    %69 = math.log %68 : vector<8x1xf32>
    %70 = vector.broadcast %69 : vector<8x1xf32> to vector<8x10xf32>
    %71 = arith.subf %65, %70 : vector<8x10xf32>
    %c0_49 = arith.constant 0 : index
    %c0_50 = arith.constant 0 : index
    %72 = vector.load %arg18[%c0_49, %c0_50] : memref<8x10xf32, #tpu.memory_space<vmem>>, vector<8x10xf32>
    tpu.vector_store %arg18[%c0_49, %c0_50], %71 {strides = array<i32>} : memref<8x10xf32, #tpu.memory_space<vmem>>, vector<8x10xf32>,
    return
  }
  func.func @transform_0(%arg0: i32) -> (i32, i32) {
    %c0_i32 = arith.constant 0 : i32
    %c0_i32_0 = arith.constant 0 : i32
    return %arg0, %c0_i32 : i32, i32
  }
  func.func @transform_1(%arg0: i32) -> (i32, i32) {
    %c0_i32 = arith.constant 0 : i32
    %c0_i32_0 = arith.constant 0 : i32
    %c0_i32_1 = arith.constant 0 : i32
    return %c0_i32, %c0_i32_0 : i32, i32
  }
  func.func @transform_2(%arg0: i32) -> (i32, i32) {
    %c0_i32 = arith.constant 0 : i32
    %c0_i32_0 = arith.constant 0 : i32
    %c0_i32_1 = arith.constant 0 : i32
    return %c0_i32, %c0_i32_0 : i32, i32
  }
  func.func @transform_3(%arg0: i32) -> (i32, i32) {
    %c0_i32 = arith.constant 0 : i32
    %c0_i32_0 = arith.constant 0 : i32
    %c0_i32_1 = arith.constant 0 : i32
    return %c0_i32, %c0_i32_0 : i32, i32
  }
  func.func @transform_4(%arg0: i32) -> (i32, i32) {
    %c0_i32 = arith.constant 0 : i32
    %c0_i32_0 = arith.constant 0 : i32
    %c0_i32_1 = arith.constant 0 : i32
    return %c0_i32, %c0_i32_0 : i32, i32
  }
  func.func @transform_5(%arg0: i32) -> (i32, i32) {
    %c0_i32 = arith.constant 0 : i32
    %c0_i32_0 = arith.constant 0 : i32
    %c0_i32_1 = arith.constant 0 : i32
    return %c0_i32, %c0_i32_0 : i32, i32
  }
  func.func @transform_6(%arg0: i32) -> (i32, i32) {
    %c0_i32 = arith.constant 0 : i32
    %c0_i32_0 = arith.constant 0 : i32
    %c0_i32_1 = arith.constant 0 : i32
    return %c0_i32, %c0_i32_0 : i32, i32
  }
  func.func @transform_7(%arg0: i32) -> (i32, i32) {
    %c0_i32 = arith.constant 0 : i32
    %c0_i32_0 = arith.constant 0 : i32
    %c0_i32_1 = arith.constant 0 : i32
    return %c0_i32, %c0_i32_0 : i32, i32
  }
  func.func @transform_8(%arg0: i32) -> (i32, i32) {
    %c0_i32 = arith.constant 0 : i32
    %c0_i32_0 = arith.constant 0 : i32
    %c0_i32_1 = arith.constant 0 : i32
    return %c0_i32, %c0_i32_0 : i32, i32
  }
  func.func @transform_9(%arg0: i32) -> (i32, i32) {
    %c0_i32 = arith.constant 0 : i32
    %c0_i32_0 = arith.constant 0 : i32
    %c0_i32_1 = arith.constant 0 : i32
    return %c0_i32, %c0_i32_0 : i32, i32
  }
  func.func @transform_10(%arg0: i32) -> (i32, i32) {
    %c0_i32 = arith.constant 0 : i32
    %c0_i32_0 = arith.constant 0 : i32
    %c0_i32_1 = arith.constant 0 : i32
    return %c0_i32, %c0_i32_0 : i32, i32
  }
  func.func @transform_11(%arg0: i32) -> (i32, i32) {
    %c0_i32 = arith.constant 0 : i32
    %c0_i32_0 = arith.constant 0 : i32
    %c0_i32_1 = arith.constant 0 : i32
    return %c0_i32, %c0_i32_0 : i32, i32
  }
  func.func @transform_12(%arg0: i32) -> (i32, i32) {
    %c0_i32 = arith.constant 0 : i32
    %c0_i32_0 = arith.constant 0 : i32
    %c0_i32_1 = arith.constant 0 : i32
    return %c0_i32, %c0_i32_0 : i32, i32
  }
  func.func @transform_13(%arg0: i32) -> (i32, i32) {
    %c0_i32 = arith.constant 0 : i32
    %c0_i32_0 = arith.constant 0 : i32
    %c0_i32_1 = arith.constant 0 : i32
    return %c0_i32, %c0_i32_0 : i32, i32
  }
  func.func @transform_14(%arg0: i32) -> (i32, i32) {
    %c0_i32 = arith.constant 0 : i32
    %c0_i32_0 = arith.constant 0 : i32
    %c0_i32_1 = arith.constant 0 : i32
    return %c0_i32, %c0_i32_0 : i32, i32
  }
  func.func @transform_15(%arg0: i32) -> (i32, i32) {
    %c0_i32 = arith.constant 0 : i32
    %c0_i32_0 = arith.constant 0 : i32
    %c0_i32_1 = arith.constant 0 : i32
    return %c0_i32, %c0_i32_0 : i32, i32
  }
  func.func @transform_16(%arg0: i32) -> (i32, i32) {
    %c0_i32 = arith.constant 0 : i32
    %c0_i32_0 = arith.constant 0 : i32
    %c0_i32_1 = arith.constant 0 : i32
    return %c0_i32, %c0_i32_0 : i32, i32
  }
  func.func @transform_17(%arg0: i32) -> (i32, i32) {
    %c0_i32 = arith.constant 0 : i32
    %c0_i32_0 = arith.constant 0 : i32
    return %arg0, %c0_i32 : i32, i32
  }
}

</mosaic_0001>

<llo_original>
// kernel: tpu_custom_call.1
$region0: #{tpu_custom_call.1}
  #allocation0 [shape = 'u32[]', space=smem, size = 0x4, offset = 0x4, fixed_abs, tag = 'smem constant byte address 0x4 - core index']
  #allocation1 [shape = 'u32[72,128]{1,0:T(1,128)}', space=vmem, size = 0x9000, scoped, tag = 'internal scratch']
  %s0 = inlined_call_operand.vmem [shape: bf16[8,784], index: 0, kind: input, shape index: {}]
  %s1 = inlined_call_operand.vmem [shape: bf16[784,32], index: 1, kind: input, shape index: {}]
  %s2 = inlined_call_operand.vmem [shape: f32[1,32], index: 2, kind: input, shape index: {}]
  %s3 = inlined_call_operand.vmem [shape: bf16[32,32], index: 3, kind: input, shape index: {}]
  %s4 = inlined_call_operand.vmem [shape: f32[1,32], index: 4, kind: input, shape index: {}]
  %s5 = inlined_call_operand.vmem [shape: bf16[32,32], index: 5, kind: input, shape index: {}]
  %s6 = inlined_call_operand.vmem [shape: f32[1,32], index: 6, kind: input, shape index: {}]
  %s7 = inlined_call_operand.vmem [shape: bf16[32,32], index: 7, kind: input, shape index: {}]
  %s8 = inlined_call_operand.vmem [shape: f32[1,32], index: 8, kind: input, shape index: {}]
  %s9 = inlined_call_operand.vmem [shape: bf16[32,32], index: 9, kind: input, shape index: {}]
  %s10 = inlined_call_operand.vmem [shape: f32[1,32], index: 10, kind: input, shape index: {}]
  %s11 = inlined_call_operand.vmem [shape: bf16[32,32], index: 11, kind: input, shape index: {}]
  %s12 = inlined_call_operand.vmem [shape: f32[1,32], index: 12, kind: input, shape index: {}]
  %s13 = inlined_call_operand.vmem [shape: bf16[32,32], index: 13, kind: input, shape index: {}]
  %s14 = inlined_call_operand.vmem [shape: f32[1,32], index: 14, kind: input, shape index: {}]
  %s15 = inlined_call_operand.vmem [shape: bf16[32,10], index: 15, kind: input, shape index: {}]
  %s16 = inlined_call_operand.vmem [shape: f32[1,10], index: 16, kind: input, shape index: {}]
  %s17 = inlined_call_operand.hbm [shape: f32[8,10], index: 17, kind: output, shape index: {}]
  %s18 = sld [smem:[#allocation0]]
  $region78: #{tpu_custom_call.1} parent=0
    _
  %s20 = ssub.s32 1, %s18
  %s21 = scalar_select 0, %s20, %s18
  $region1: #{tpu_custom_call.1} parent=0
    #allocation2 [shape = 'u8[4096]{0}', space=vmem, size = 0x1000, scoped, tag = 'output window, operand 0, single buffered']
    #allocation3 [shape = 's32[1]{0}', space=sflag, size = 0x4, scoped, tag = 'scoped memory for tpu_custom_call.1']
    %22 = vsyncpa [#allocation3], 0
    // Predicated region
    $region2: #{tpu_custom_call.1} parent=1 // pred_check
      _
    $region3: #{tpu_custom_call.1} parent=1 // pred_check_branch
      %24 = sbr.rel (0) target = $region5
    $region4: #{tpu_custom_call.1} parent=1 // pred_region
      _
    $region5: #{tpu_custom_call.1} parent=1 // pred_fallthru
      _
    // Predicated region
    $region6: #{tpu_custom_call.1} parent=1 // pred_check
      _
    $region7: #{tpu_custom_call.1} parent=1 // pred_check_branch
      %26 = sbr.rel (0) target = $region9
    $region8: #{tpu_custom_call.1} parent=1 // pred_region
      _
    $region9: #{tpu_custom_call.1} parent=1 // pred_fallthru
      _
    // Predicated region
    $region10: #{tpu_custom_call.1} parent=1 // pred_check
      _
    $region11: #{tpu_custom_call.1} parent=1 // pred_check_branch
      %28 = sbr.rel (0) target = $region13
    $region12: #{tpu_custom_call.1} parent=1 // pred_region
      _
    $region13: #{tpu_custom_call.1} parent=1 // pred_fallthru
      _
    // Predicated region
    $region14: #{tpu_custom_call.1} parent=1 // pred_check
      _
    $region15: #{tpu_custom_call.1} parent=1 // pred_check_branch
      %30 = sbr.rel (0) target = $region17
    $region16: #{tpu_custom_call.1} parent=1 // pred_region
      _
    $region17: #{tpu_custom_call.1} parent=1 // pred_fallthru
      _
    // Predicated region
    $region18: #{tpu_custom_call.1} parent=1 // pred_check
      _
    $region19: #{tpu_custom_call.1} parent=1 // pred_check_branch
      %32 = sbr.rel (0) target = $region21
    $region20: #{tpu_custom_call.1} parent=1 // pred_region
      _
    $region21: #{tpu_custom_call.1} parent=1 // pred_fallthru
      _
    // Predicated region
    $region22: #{tpu_custom_call.1} parent=1 // pred_check
      _
    $region23: #{tpu_custom_call.1} parent=1 // pred_check_branch
      %34 = sbr.rel (0) target = $region25
    $region24: #{tpu_custom_call.1} parent=1 // pred_region
      _
    $region25: #{tpu_custom_call.1} parent=1 // pred_fallthru
      _
    // Predicated region
    $region26: #{tpu_custom_call.1} parent=1 // pred_check
      _
    $region27: #{tpu_custom_call.1} parent=1 // pred_check_branch
      %36 = sbr.rel (0) target = $region29
    $region28: #{tpu_custom_call.1} parent=1 // pred_region
      _
    $region29: #{tpu_custom_call.1} parent=1 // pred_fallthru
      _
    // Predicated region
    $region30: #{tpu_custom_call.1} parent=1 // pred_check
      _
    $region31: #{tpu_custom_call.1} parent=1 // pred_check_branch
      %38 = sbr.rel (0) target = $region33
    $region32: #{tpu_custom_call.1} parent=1 // pred_region
      _
    $region33: #{tpu_custom_call.1} parent=1 // pred_fallthru
      _
    // Predicated region
    $region34: #{tpu_custom_call.1} parent=1 // pred_check
      _
    $region35: #{tpu_custom_call.1} parent=1 // pred_check_branch
      %40 = sbr.rel (0) target = $region37
    $region36: #{tpu_custom_call.1} parent=1 // pred_region
      _
    $region37: #{tpu_custom_call.1} parent=1 // pred_fallthru
      _
    // Predicated region
    $region38: #{tpu_custom_call.1} parent=1 // pred_check
      _
    $region39: #{tpu_custom_call.1} parent=1 // pred_check_branch
      %42 = sbr.rel (0) target = $region41
    $region40: #{tpu_custom_call.1} parent=1 // pred_region
      _
    $region41: #{tpu_custom_call.1} parent=1 // pred_fallthru
      _
    // Predicated region
    $region42: #{tpu_custom_call.1} parent=1 // pred_check
      _
    $region43: #{tpu_custom_call.1} parent=1 // pred_check_branch
      %44 = sbr.rel (0) target = $region45
    $region44: #{tpu_custom_call.1} parent=1 // pred_region
      _
    $region45: #{tpu_custom_call.1} parent=1 // pred_fallthru
      _
    // Predicated region
    $region46: #{tpu_custom_call.1} parent=1 // pred_check
      _
    $region47: #{tpu_custom_call.1} parent=1 // pred_check_branch
      %46 = sbr.rel (0) target = $region49
    $region48: #{tpu_custom_call.1} parent=1 // pred_region
      _
    $region49: #{tpu_custom_call.1} parent=1 // pred_fallthru
      _
    // Predicated region
    $region50: #{tpu_custom_call.1} parent=1 // pred_check
      _
    $region51: #{tpu_custom_call.1} parent=1 // pred_check_branch
      %48 = sbr.rel (0) target = $region53
    $region52: #{tpu_custom_call.1} parent=1 // pred_region
      _
    $region53: #{tpu_custom_call.1} parent=1 // pred_fallthru
      _
    // Predicated region
    $region54: #{tpu_custom_call.1} parent=1 // pred_check
      _
    $region55: #{tpu_custom_call.1} parent=1 // pred_check_branch
      %50 = sbr.rel (0) target = $region57
    $region56: #{tpu_custom_call.1} parent=1 // pred_region
      _
    $region57: #{tpu_custom_call.1} parent=1 // pred_fallthru
      _
    // Predicated region
    $region58: #{tpu_custom_call.1} parent=1 // pred_check
      _
    $region59: #{tpu_custom_call.1} parent=1 // pred_check_branch
      %52 = sbr.rel (0) target = $region61
    $region60: #{tpu_custom_call.1} parent=1 // pred_region
      _
    $region61: #{tpu_custom_call.1} parent=1 // pred_fallthru
      _
    // Predicated region
    $region62: #{tpu_custom_call.1} parent=1 // pred_check
      _
    $region63: #{tpu_custom_call.1} parent=1 // pred_check_branch
      %54 = sbr.rel (0) target = $region65
    $region64: #{tpu_custom_call.1} parent=1 // pred_region
      _
    $region65: #{tpu_custom_call.1} parent=1 // pred_fallthru
      _
    // Predicated region
    $region66: #{tpu_custom_call.1} parent=1 // pred_check
      _
    $region67: #{tpu_custom_call.1} parent=1 // pred_check_branch
      %56 = sbr.rel (0) target = $region69
    $region68: #{tpu_custom_call.1} parent=1 // pred_region
      _
    $region69: #{tpu_custom_call.1} parent=1 // pred_fallthru
      _
    %v58 = vld [vmem:[%s0] sm:$0xff]
    %v59 = vld [vmem:[%s0 + $0x8] sm:$0xff]
    %v60 = vld [vmem:[%s0 + $0x10] sm:$0xff]
    %v61 = vld [vmem:[%s0 + $0x18] sm:$0xf]
    %v62 = vld [vmem:[%s1] sm:$0xf]
    %v63 = vld [vmem:[%s1 + $0x4] sm:$0xf]
    %v64 = vld [vmem:[%s1 + $0x8] sm:$0xf]
    %v65 = vld [vmem:[%s1 + $0xc] sm:$0xf]
    %v66 = vld [vmem:[%s1 + $0x10] sm:$0xf]
    %v67 = vld [vmem:[%s1 + $0x14] sm:$0xf]
    %v68 = vld [vmem:[%s1 + $0x18] sm:$0xf]
    %v69 = vld [vmem:[%s1 + $0x1c] sm:$0xf]
    %v70 = vld [vmem:[%s1 + $0x20] sm:$0xf]
    %v71 = vld [vmem:[%s1 + $0x24] sm:$0xf]
    %v72 = vld [vmem:[%s1 + $0x28] sm:$0xf]
    %v73 = vld [vmem:[%s1 + $0x2c] sm:$0xf]
    %v74 = vld [vmem:[%s1 + $0x30] sm:$0xf]
    %v75 = vld [vmem:[%s1 + $0x34] sm:$0xf]
    %v76 = vld [vmem:[%s1 + $0x38] sm:$0xf]
    %v77 = vld [vmem:[%s1 + $0x3c] sm:$0xf]
    %v78 = vld [vmem:[%s1 + $0x40] sm:$0xf]
    %v79 = vld [vmem:[%s1 + $0x44] sm:$0xf]
    %v80 = vld [vmem:[%s1 + $0x48] sm:$0xf]
    %v81 = vld [vmem:[%s1 + $0x4c] sm:$0xf]
    %v82 = vld [vmem:[%s1 + $0x50] sm:$0xf]
    %v83 = vld [vmem:[%s1 + $0x54] sm:$0xf]
    %v84 = vld [vmem:[%s1 + $0x58] sm:$0xf]
    %v85 = vld [vmem:[%s1 + $0x5c] sm:$0xf]
    %v86 = vld [vmem:[%s1 + $0x60] sm:$0xf]
    %v87 = vld [vmem:[%s1 + $0x64] sm:$0xf]
    %v88 = vld [vmem:[%s1 + $0x68] sm:$0xf]
    %v89 = vld [vmem:[%s1 + $0x6c] sm:$0xf]
    %v90 = vld [vmem:[%s1 + $0x70] sm:$0xf]
    %v91 = vld [vmem:[%s1 + $0x74] sm:$0xf]
    %v92 = vld [vmem:[%s1 + $0x78] sm:$0xf]
    %v93 = vld [vmem:[%s1 + $0x7c] sm:$0xf]
    %v94 = vld [vmem:[%s1 + $0x80] sm:$0xf]
    %v95 = vld [vmem:[%s1 + $0x84] sm:$0xf]
    %v96 = vld [vmem:[%s1 + $0x88] sm:$0xf]
    %v97 = vld [vmem:[%s1 + $0x8c] sm:$0xf]
    %v98 = vld [vmem:[%s1 + $0x90] sm:$0xf]
    %v99 = vld [vmem:[%s1 + $0x94] sm:$0xf]
    %v100 = vld [vmem:[%s1 + $0x98] sm:$0xf]
    %v101 = vld [vmem:[%s1 + $0x9c] sm:$0xf]
    %v102 = vld [vmem:[%s1 + $0xa0] sm:$0xf]
    %v103 = vld [vmem:[%s1 + $0xa4] sm:$0xf]
    %v104 = vld [vmem:[%s1 + $0xa8] sm:$0xf]
    %v105 = vld [vmem:[%s1 + $0xac] sm:$0xf]
    %v106 = vld [vmem:[%s1 + $0xb0] sm:$0xf]
    %v107 = vld [vmem:[%s1 + $0xb4] sm:$0xf]
    %v108 = vld [vmem:[%s1 + $0xb8] sm:$0xf]
    %v109 = vld [vmem:[%s1 + $0xbc] sm:$0xf]
    %v110 = vld [vmem:[%s1 + $0xc0] sm:$0xf]
    %v111 = vld [vmem:[%s1 + $0xc4] sm:$0xf]
    %v112 = vld [vmem:[%s1 + $0xc8] sm:$0xf]
    %v113 = vld [vmem:[%s1 + $0xcc] sm:$0xf]
    %v114 = vld [vmem:[%s1 + $0xd0] sm:$0xf]
    %v115 = vld [vmem:[%s1 + $0xd4] sm:$0xf]
    %v116 = vld [vmem:[%s1 + $0xd8] sm:$0xf]
    %v117 = vld [vmem:[%s1 + $0xdc] sm:$0xf]
    %v118 = vld [vmem:[%s1 + $0xe0] sm:$0xf]
    %v119 = vld [vmem:[%s1 + $0xe4] sm:$0xf]
    %v120 = vld [vmem:[%s1 + $0xe8] sm:$0xf]
    %v121 = vld [vmem:[%s1 + $0xec] sm:$0xf]
    %v122 = vld [vmem:[%s1 + $0xf0] sm:$0xf]
    %v123 = vld [vmem:[%s1 + $0xf4] sm:$0xf]
    %v124 = vld [vmem:[%s1 + $0xf8] sm:$0xf]
    %v125 = vld [vmem:[%s1 + $0xfc] sm:$0xf]
    %v126 = vld [vmem:[%s1 + $0x100] sm:$0xf]
    %v127 = vld [vmem:[%s1 + $0x104] sm:$0xf]
    %v128 = vld [vmem:[%s1 + $0x108] sm:$0xf]
    %v129 = vld [vmem:[%s1 + $0x10c] sm:$0xf]
    %v130 = vld [vmem:[%s1 + $0x110] sm:$0xf]
    %v131 = vld [vmem:[%s1 + $0x114] sm:$0xf]
    %v132 = vld [vmem:[%s1 + $0x118] sm:$0xf]
    %v133 = vld [vmem:[%s1 + $0x11c] sm:$0xf]
    %v134 = vld [vmem:[%s1 + $0x120] sm:$0xf]
    %v135 = vld [vmem:[%s1 + $0x124] sm:$0xf]
    %v136 = vld [vmem:[%s1 + $0x128] sm:$0xf]
    %v137 = vld [vmem:[%s1 + $0x12c] sm:$0xf]
    %v138 = vld [vmem:[%s1 + $0x130] sm:$0xf]
    %v139 = vld [vmem:[%s1 + $0x134] sm:$0xf]
    %v140 = vld [vmem:[%s1 + $0x138] sm:$0xf]
    %v141 = vld [vmem:[%s1 + $0x13c] sm:$0xf]
    %v142 = vld [vmem:[%s1 + $0x140] sm:$0xf]
    %v143 = vld [vmem:[%s1 + $0x144] sm:$0xf]
    %v144 = vld [vmem:[%s1 + $0x148] sm:$0xf]
    %v145 = vld [vmem:[%s1 + $0x14c] sm:$0xf]
    %v146 = vld [vmem:[%s1 + $0x150] sm:$0xf]
    %v147 = vld [vmem:[%s1 + $0x154] sm:$0xf]
    %v148 = vld [vmem:[%s1 + $0x158] sm:$0xf]
    %v149 = vld [vmem:[%s1 + $0x15c] sm:$0xf]
    %v150 = vld [vmem:[%s1 + $0x160] sm:$0xf]
    %v151 = vld [vmem:[%s1 + $0x164] sm:$0xf]
    %v152 = vld [vmem:[%s1 + $0x168] sm:$0xf]
    %v153 = vld [vmem:[%s1 + $0x16c] sm:$0xf]
    %v154 = vld [vmem:[%s1 + $0x170] sm:$0xf]
    %v155 = vld [vmem:[%s1 + $0x174] sm:$0xf]
    %v156 = vld [vmem:[%s1 + $0x178] sm:$0xf]
    %v157 = vld [vmem:[%s1 + $0x17c] sm:$0xf]
    %v158 = vld [vmem:[%s1 + $0x180] sm:$0xf]
    %v159 = vld [vmem:[%s1 + $0x184] sm:$0xf]
    %v160 = vld [vmem:[%s2] sm:$0x1]
    %v162 = vperm.slane %v160, 0
    %v168 = vunpack.c.l.b16 %v58
    %v169 = vunpack.c.h.b16 %v58
    %v170 = vunpack.c.l.b16 %v59
    %v171 = vunpack.c.h.b16 %v59
    %v172 = vunpack.c.l.b16 %v60
    %v173 = vunpack.c.h.b16 %v60
    %v174 = vunpack.c.l.b16 %v61
    %v175 = vpack.c.b16 %v168, %v168
    %v176 = vpack.c.b16 %v169, %v169
    %v177 = vpack.c.b16 %v170, %v170
    %v178 = vpack.c.b16 %v171, %v171
    %v179 = vpack.c.b16 %v172, %v172
    %v180 = vpack.c.b16 %v173, %v173
    %v181 = vpack.c.b16 %v174, %v174
    %v286 = vunpack.c.l.b16 %v62
    %v287 = vunpack.c.l.b16 %v63
    %v288 = vunpack.c.l.b16 %v64
    %v289 = vunpack.c.l.b16 %v65
    %v290 = vunpack.c.l.b16 %v66
    %v291 = vunpack.c.l.b16 %v67
    %v292 = vunpack.c.l.b16 %v68
    %v293 = vunpack.c.l.b16 %v69
    %v294 = vunpack.c.l.b16 %v70
    %v295 = vunpack.c.l.b16 %v71
    %v296 = vunpack.c.l.b16 %v72
    %v297 = vunpack.c.l.b16 %v73
    %v298 = vunpack.c.l.b16 %v74
    %v299 = vunpack.c.l.b16 %v75
    %v300 = vunpack.c.l.b16 %v76
    %v301 = vunpack.c.l.b16 %v77
    %v302 = vunpack.c.l.b16 %v78
    %v303 = vunpack.c.l.b16 %v79
    %v304 = vunpack.c.l.b16 %v80
    %v305 = vunpack.c.l.b16 %v81
    %v306 = vunpack.c.l.b16 %v82
    %v307 = vunpack.c.l.b16 %v83
    %v308 = vunpack.c.l.b16 %v84
    %v309 = vunpack.c.l.b16 %v85
    %v310 = vunpack.c.l.b16 %v86
    %v311 = vunpack.c.l.b16 %v87
    %v312 = vunpack.c.l.b16 %v88
    %v313 = vunpack.c.l.b16 %v89
    %v314 = vunpack.c.l.b16 %v90
    %v315 = vunpack.c.l.b16 %v91
    %v316 = vunpack.c.l.b16 %v92
    %v317 = vunpack.c.l.b16 %v93
    %v318 = vunpack.c.l.b16 %v94
    %v319 = vunpack.c.l.b16 %v95
    %v320 = vunpack.c.l.b16 %v96
    %v321 = vunpack.c.l.b16 %v97
    %v322 = vunpack.c.l.b16 %v98
    %v323 = vunpack.c.l.b16 %v99
    %v324 = vunpack.c.l.b16 %v100
    %v325 = vunpack.c.l.b16 %v101
    %v326 = vunpack.c.l.b16 %v102
    %v327 = vunpack.c.l.b16 %v103
    %v328 = vunpack.c.l.b16 %v104
    %v329 = vunpack.c.l.b16 %v105
    %v330 = vunpack.c.l.b16 %v106
    %v331 = vunpack.c.l.b16 %v107
    %v332 = vunpack.c.l.b16 %v108
    %v333 = vunpack.c.l.b16 %v109
    %v334 = vunpack.c.l.b16 %v110
    %v335 = vunpack.c.l.b16 %v111
    %v336 = vunpack.c.l.b16 %v112
    %v337 = vunpack.c.l.b16 %v113
    %v338 = vunpack.c.l.b16 %v114
    %v339 = vunpack.c.l.b16 %v115
    %v340 = vunpack.c.l.b16 %v116
    %v341 = vunpack.c.l.b16 %v117
    %v342 = vunpack.c.l.b16 %v118
    %v343 = vunpack.c.l.b16 %v119
    %v344 = vunpack.c.l.b16 %v120
    %v345 = vunpack.c.l.b16 %v121
    %v346 = vunpack.c.l.b16 %v122
    %v347 = vunpack.c.l.b16 %v123
    %v348 = vunpack.c.l.b16 %v124
    %v349 = vunpack.c.l.b16 %v125
    %v350 = vunpack.c.l.b16 %v126
    %v351 = vunpack.c.l.b16 %v127
    %v352 = vunpack.c.l.b16 %v128
    %v353 = vunpack.c.l.b16 %v129
    %v354 = vunpack.c.l.b16 %v130
    %v355 = vunpack.c.l.b16 %v131
    %v356 = vunpack.c.l.b16 %v132
    %v357 = vunpack.c.l.b16 %v133
    %v358 = vunpack.c.l.b16 %v134
    %v359 = vunpack.c.l.b16 %v135
    %v360 = vunpack.c.l.b16 %v136
    %v361 = vunpack.c.l.b16 %v137
    %v362 = vunpack.c.l.b16 %v138
    %v363 = vunpack.c.l.b16 %v139
    %v364 = vunpack.c.l.b16 %v140
    %v365 = vunpack.c.l.b16 %v141
    %v366 = vunpack.c.l.b16 %v142
    %v367 = vunpack.c.l.b16 %v143
    %v368 = vunpack.c.l.b16 %v144
    %v369 = vunpack.c.l.b16 %v145
    %v370 = vunpack.c.l.b16 %v146
    %v371 = vunpack.c.l.b16 %v147
    %v372 = vunpack.c.l.b16 %v148
    %v373 = vunpack.c.l.b16 %v149
    %v374 = vunpack.c.l.b16 %v150
    %v375 = vunpack.c.l.b16 %v151
    %v376 = vunpack.c.l.b16 %v152
    %v377 = vunpack.c.l.b16 %v153
    %v378 = vunpack.c.l.b16 %v154
    %v379 = vunpack.c.l.b16 %v155
    %v380 = vunpack.c.l.b16 %v156
    %v381 = vunpack.c.l.b16 %v157
    %v382 = vunpack.c.l.b16 %v158
    %v383 = vunpack.c.l.b16 %v159
    %v384 = vpack.c.b16 %v287, %v286
    %v385 = vpack.c.b16 %v289, %v288
    %v386 = vpack.c.b16 %v291, %v290
    %v387 = vpack.c.b16 %v293, %v292
    %v388 = vpack.c.b16 %v295, %v294
    %v389 = vpack.c.b16 %v297, %v296
    %v390 = vpack.c.b16 %v299, %v298
    %v391 = vpack.c.b16 %v301, %v300
    %v392 = vpack.c.b16 %v303, %v302
    %v393 = vpack.c.b16 %v305, %v304
    %v394 = vpack.c.b16 %v307, %v306
    %v395 = vpack.c.b16 %v309, %v308
    %v396 = vpack.c.b16 %v311, %v310
    %v397 = vpack.c.b16 %v313, %v312
    %v398 = vpack.c.b16 %v315, %v314
    %v399 = vpack.c.b16 %v317, %v316
    %v400 = vpack.c.b16 %v319, %v318
    %v401 = vpack.c.b16 %v321, %v320
    %v402 = vpack.c.b16 %v323, %v322
    %v403 = vpack.c.b16 %v325, %v324
    %v404 = vpack.c.b16 %v327, %v326
    %v405 = vpack.c.b16 %v329, %v328
    %v406 = vpack.c.b16 %v331, %v330
    %v407 = vpack.c.b16 %v333, %v332
    %v408 = vpack.c.b16 %v335, %v334
    %v409 = vpack.c.b16 %v337, %v336
    %v410 = vpack.c.b16 %v339, %v338
    %v411 = vpack.c.b16 %v341, %v340
    %v412 = vpack.c.b16 %v343, %v342
    %v413 = vpack.c.b16 %v345, %v344
    %v414 = vpack.c.b16 %v347, %v346
    %v415 = vpack.c.b16 %v349, %v348
    %v416 = vpack.c.b16 %v351, %v350
    %v417 = vpack.c.b16 %v353, %v352
    %v418 = vpack.c.b16 %v355, %v354
    %v419 = vpack.c.b16 %v357, %v356
    %v420 = vpack.c.b16 %v359, %v358
    %v421 = vpack.c.b16 %v361, %v360
    %v422 = vpack.c.b16 %v363, %v362
    %v423 = vpack.c.b16 %v365, %v364
    %v424 = vpack.c.b16 %v367, %v366
    %v425 = vpack.c.b16 %v369, %v368
    %v426 = vpack.c.b16 %v371, %v370
    %v427 = vpack.c.b16 %v373, %v372
    %v428 = vpack.c.b16 %v375, %v374
    %v429 = vpack.c.b16 %v377, %v376
    %v430 = vpack.c.b16 %v379, %v378
    %v431 = vpack.c.b16 %v381, %v380
    %v432 = vpack.c.b16 %v383, %v382
    %vm482 = vcmask 130048
    %v484 = vsel %vm482, %v181, 0
    %486 = vmatpush.bf16.msra.mxu0 %v391
    %487 = vmatpush.bf16.msra.mxu0 %v390
    %488 = vmatpush.bf16.msra.mxu0 %v389
    %489 = vmatpush.bf16.msra.mxu0 %v388
    %490 = vmatpush.bf16.msra.mxu0 %v387
    %491 = vmatpush.bf16.msra.mxu0 %v386
    %492 = vmatpush.bf16.msra.mxu0 %v385
    %493 = vmatpush.bf16.msra.mxu0 %v384
    %494 = vmatmul.bf16.gmra.mxu0 %v175
    %v495 = vpop.f32.mrf.mxu0
    %v496 = vadd.f32 %v162, %v495
    %v497 = vpop.f32.mrf.mxu0
    %498 = vdwg.mxu0
    %499 = vmatpush.bf16.msra.mxu0 %v399
    %500 = vmatpush.bf16.msra.mxu0 %v398
    %501 = vmatpush.bf16.msra.mxu0 %v397
    %502 = vmatpush.bf16.msra.mxu0 %v396
    %503 = vmatpush.bf16.msra.mxu0 %v395
    %504 = vmatpush.bf16.msra.mxu0 %v394
    %505 = vmatpush.bf16.msra.mxu0 %v393
    %506 = vmatpush.bf16.msra.mxu0 %v392
    %507 = vmatmul.bf16.gmra.mxu0 %v176
    %v508 = vpop.f32.mrf.mxu0
    %v509 = vadd.f32 %v496, %v508
    %v510 = vpop.f32.mrf.mxu0
    %511 = vdwg.mxu0
    %512 = vmatpush.bf16.msra.mxu0 %v407
    %513 = vmatpush.bf16.msra.mxu0 %v406
    %514 = vmatpush.bf16.msra.mxu0 %v405
    %515 = vmatpush.bf16.msra.mxu0 %v404
    %516 = vmatpush.bf16.msra.mxu0 %v403
    %517 = vmatpush.bf16.msra.mxu0 %v402
    %518 = vmatpush.bf16.msra.mxu0 %v401
    %519 = vmatpush.bf16.msra.mxu0 %v400
    %520 = vmatmul.bf16.gmra.mxu0 %v177
    %v521 = vpop.f32.mrf.mxu0
    %v522 = vadd.f32 %v509, %v521
    %v523 = vpop.f32.mrf.mxu0
    %524 = vdwg.mxu0
    %525 = vmatpush.bf16.msra.mxu0 %v415
    %526 = vmatpush.bf16.msra.mxu0 %v414
    %527 = vmatpush.bf16.msra.mxu0 %v413
    %528 = vmatpush.bf16.msra.mxu0 %v412
    %529 = vmatpush.bf16.msra.mxu0 %v411
    %530 = vmatpush.bf16.msra.mxu0 %v410
    %531 = vmatpush.bf16.msra.mxu0 %v409
    %532 = vmatpush.bf16.msra.mxu0 %v408
    %533 = vmatmul.bf16.gmra.mxu0 %v178
    %v534 = vpop.f32.mrf.mxu0
    %v535 = vadd.f32 %v522, %v534
    %v536 = vpop.f32.mrf.mxu0
    %537 = vdwg.mxu0
    %538 = vmatpush.bf16.msra.mxu0 %v423
    %539 = vmatpush.bf16.msra.mxu0 %v422
    %540 = vmatpush.bf16.msra.mxu0 %v421
    %541 = vmatpush.bf16.msra.mxu0 %v420
    %542 = vmatpush.bf16.msra.mxu0 %v419
    %543 = vmatpush.bf16.msra.mxu0 %v418
    %544 = vmatpush.bf16.msra.mxu0 %v417
    %545 = vmatpush.bf16.msra.mxu0 %v416
    %546 = vmatmul.bf16.gmra.mxu0 %v179
    %v547 = vpop.f32.mrf.mxu0
    %v548 = vadd.f32 %v535, %v547
    %v549 = vpop.f32.mrf.mxu0
    %550 = vdwg.mxu0
    %551 = vmatpush.bf16.msra.mxu0 %v431
    %552 = vmatpush.bf16.msra.mxu0 %v430
    %553 = vmatpush.bf16.msra.mxu0 %v429
    %554 = vmatpush.bf16.msra.mxu0 %v428
    %555 = vmatpush.bf16.msra.mxu0 %v427
    %556 = vmatpush.bf16.msra.mxu0 %v426
    %557 = vmatpush.bf16.msra.mxu0 %v425
    %558 = vmatpush.bf16.msra.mxu0 %v424
    %559 = vmatmul.bf16.gmra.mxu0 %v180
    %v560 = vpop.f32.mrf.mxu0
    %v561 = vadd.f32 %v548, %v560
    %v562 = vpop.f32.mrf.mxu0
    %563 = vdwg.mxu0
    %564 = vmatpush.bf16.msra.mxu0 0
    %565 = vmatpush.bf16.msra.mxu0 0
    %566 = vmatpush.bf16.msra.mxu0 0
    %567 = vmatpush.bf16.msra.mxu0 0
    %568 = vmatpush.bf16.msra.mxu0 0
    %569 = vmatpush.bf16.msra.mxu0 0
    %570 = vmatpush.bf16.msra.mxu0 0
    %571 = vmatpush.bf16.msra.mxu0 %v432
    %572 = vmatmul.bf16.gmra.mxu0 %v484
    %v573 = vpop.f32.mrf.mxu0
    %v574 = vadd.f32 %v561, %v573
    %v575 = vpop.f32.mrf.mxu0
    %576 = vdwg.mxu0
    %v577 = vmax.f32 %v574, 0.0
    %v578 = vpack.c.bf16 %v577, %v577
    %v579 = vld [vmem:[%s3] sm:$0xf]
    %v580 = vld [vmem:[%s3 + $0x4] sm:$0xf]
    %v581 = vld [vmem:[%s3 + $0x8] sm:$0xf]
    %v582 = vld [vmem:[%s3 + $0xc] sm:$0xf]
    %v583 = vld [vmem:[%s4] sm:$0x1]
    %v585 = vperm.slane %v583, 0
    %v591 = vunpack.c.l.b16 %v579
    %v592 = vunpack.c.l.b16 %v580
    %v593 = vunpack.c.l.b16 %v581
    %v594 = vunpack.c.l.b16 %v582
    %v595 = vpack.c.b16 %v592, %v591
    %v596 = vpack.c.b16 %v594, %v593
    %vm599 = vcmask 261120
    %v601 = vsel %vm599, %v578, 0
    %603 = vmatpush.bf16.msra.mxu0 0
    %604 = vmatpush.bf16.msra.mxu0 0
    %605 = vmatpush.bf16.msra.mxu0 0
    %606 = vmatpush.bf16.msra.mxu0 0
    %607 = vmatpush.bf16.msra.mxu0 0
    %608 = vmatpush.bf16.msra.mxu0 0
    %609 = vmatpush.bf16.msra.mxu0 %v596
    %610 = vmatpush.bf16.msra.mxu0 %v595
    %611 = vmatmul.bf16.gmra.mxu0 %v601
    %v612 = vpop.f32.mrf.mxu0
    %v613 = vadd.f32 %v585, %v612
    %v614 = vpop.f32.mrf.mxu0
    %615 = vdwg.mxu0
    %v616 = vmax.f32 %v613, 0.0
    %v617 = vpack.c.bf16 %v616, %v616
    %v618 = vld [vmem:[%s5] sm:$0xf]
    %v619 = vld [vmem:[%s5 + $0x4] sm:$0xf]
    %v620 = vld [vmem:[%s5 + $0x8] sm:$0xf]
    %v621 = vld [vmem:[%s5 + $0xc] sm:$0xf]
    %v622 = vld [vmem:[%s6] sm:$0x1]
    %v624 = vperm.slane %v622, 0
    %v630 = vunpack.c.l.b16 %v618
    %v631 = vunpack.c.l.b16 %v619
    %v632 = vunpack.c.l.b16 %v620
    %v633 = vunpack.c.l.b16 %v621
    %v634 = vpack.c.b16 %v631, %v630
    %v635 = vpack.c.b16 %v633, %v632
    %v639 = vsel %vm599, %v617, 0
    %641 = vmatpush.bf16.msra.mxu0 0
    %642 = vmatpush.bf16.msra.mxu0 0
    %643 = vmatpush.bf16.msra.mxu0 0
    %644 = vmatpush.bf16.msra.mxu0 0
    %645 = vmatpush.bf16.msra.mxu0 0
    %646 = vmatpush.bf16.msra.mxu0 0
    %647 = vmatpush.bf16.msra.mxu0 %v635
    %648 = vmatpush.bf16.msra.mxu0 %v634
    %649 = vmatmul.bf16.gmra.mxu0 %v639
    %v650 = vpop.f32.mrf.mxu0
    %v651 = vadd.f32 %v624, %v650
    %v652 = vpop.f32.mrf.mxu0
    %653 = vdwg.mxu0
    %v654 = vmax.f32 %v651, 0.0
    %v655 = vpack.c.bf16 %v654, %v654
    %v656 = vld [vmem:[%s7] sm:$0xf]
    %v657 = vld [vmem:[%s7 + $0x4] sm:$0xf]
    %v658 = vld [vmem:[%s7 + $0x8] sm:$0xf]
    %v659 = vld [vmem:[%s7 + $0xc] sm:$0xf]
    %v660 = vld [vmem:[%s8] sm:$0x1]
    %v662 = vperm.slane %v660, 0
    %v668 = vunpack.c.l.b16 %v656
    %v669 = vunpack.c.l.b16 %v657
    %v670 = vunpack.c.l.b16 %v658
    %v671 = vunpack.c.l.b16 %v659
    %v672 = vpack.c.b16 %v669, %v668
    %v673 = vpack.c.b16 %v671, %v670
    %v677 = vsel %vm599, %v655, 0
    %679 = vmatpush.bf16.msra.mxu0 0
    %680 = vmatpush.bf16.msra.mxu0 0
    %681 = vmatpush.bf16.msra.mxu0 0
    %682 = vmatpush.bf16.msra.mxu0 0
    %683 = vmatpush.bf16.msra.mxu0 0
    %684 = vmatpush.bf16.msra.mxu0 0
    %685 = vmatpush.bf16.msra.mxu0 %v673
    %686 = vmatpush.bf16.msra.mxu0 %v672
    %687 = vmatmul.bf16.gmra.mxu0 %v677
    %v688 = vpop.f32.mrf.mxu0
    %v689 = vadd.f32 %v662, %v688
    %v690 = vpop.f32.mrf.mxu0
    %691 = vdwg.mxu0
    %v692 = vmax.f32 %v689, 0.0
    %v693 = vpack.c.bf16 %v692, %v692
    %v694 = vld [vmem:[%s9] sm:$0xf]
    %v695 = vld [vmem:[%s9 + $0x4] sm:$0xf]
    %v696 = vld [vmem:[%s9 + $0x8] sm:$0xf]
    %v697 = vld [vmem:[%s9 + $0xc] sm:$0xf]
    %v698 = vld [vmem:[%s10] sm:$0x1]
    %v700 = vperm.slane %v698, 0
    %v706 = vunpack.c.l.b16 %v694
    %v707 = vunpack.c.l.b16 %v695
    %v708 = vunpack.c.l.b16 %v696
    %v709 = vunpack.c.l.b16 %v697
    %v710 = vpack.c.b16 %v707, %v706
    %v711 = vpack.c.b16 %v709, %v708
    %v715 = vsel %vm599, %v693, 0
    %717 = vmatpush.bf16.msra.mxu0 0
    %718 = vmatpush.bf16.msra.mxu0 0
    %719 = vmatpush.bf16.msra.mxu0 0
    %720 = vmatpush.bf16.msra.mxu0 0
    %721 = vmatpush.bf16.msra.mxu0 0
    %722 = vmatpush.bf16.msra.mxu0 0
    %723 = vmatpush.bf16.msra.mxu0 %v711
    %724 = vmatpush.bf16.msra.mxu0 %v710
    %725 = vmatmul.bf16.gmra.mxu0 %v715
    %v726 = vpop.f32.mrf.mxu0
    %v727 = vadd.f32 %v700, %v726
    %v728 = vpop.f32.mrf.mxu0
    %729 = vdwg.mxu0
    %v730 = vmax.f32 %v727, 0.0
    %v731 = vpack.c.bf16 %v730, %v730
    %v732 = vld [vmem:[%s11] sm:$0xf]
    %v733 = vld [vmem:[%s11 + $0x4] sm:$0xf]
    %v734 = vld [vmem:[%s11 + $0x8] sm:$0xf]
    %v735 = vld [vmem:[%s11 + $0xc] sm:$0xf]
    %v736 = vld [vmem:[%s12] sm:$0x1]
    %v738 = vperm.slane %v736, 0
    %v744 = vunpack.c.l.b16 %v732
    %v745 = vunpack.c.l.b16 %v733
    %v746 = vunpack.c.l.b16 %v734
    %v747 = vunpack.c.l.b16 %v735
    %v748 = vpack.c.b16 %v745, %v744
    %v749 = vpack.c.b16 %v747, %v746
    %v753 = vsel %vm599, %v731, 0
    %755 = vmatpush.bf16.msra.mxu0 0
    %756 = vmatpush.bf16.msra.mxu0 0
    %757 = vmatpush.bf16.msra.mxu0 0
    %758 = vmatpush.bf16.msra.mxu0 0
    %759 = vmatpush.bf16.msra.mxu0 0
    %760 = vmatpush.bf16.msra.mxu0 0
    %761 = vmatpush.bf16.msra.mxu0 %v749
    %762 = vmatpush.bf16.msra.mxu0 %v748
    %763 = vmatmul.bf16.gmra.mxu0 %v753
    %v764 = vpop.f32.mrf.mxu0
    %v765 = vadd.f32 %v738, %v764
    %v766 = vpop.f32.mrf.mxu0
    %767 = vdwg.mxu0
    %v768 = vmax.f32 %v765, 0.0
    %v769 = vpack.c.bf16 %v768, %v768
    %v770 = vld [vmem:[%s13] sm:$0xf]
    %v771 = vld [vmem:[%s13 + $0x4] sm:$0xf]
    %v772 = vld [vmem:[%s13 + $0x8] sm:$0xf]
    %v773 = vld [vmem:[%s13 + $0xc] sm:$0xf]
    %v774 = vld [vmem:[%s14] sm:$0x1]
    %v776 = vperm.slane %v774, 0
    %v782 = vunpack.c.l.b16 %v770
    %v783 = vunpack.c.l.b16 %v771
    %v784 = vunpack.c.l.b16 %v772
    %v785 = vunpack.c.l.b16 %v773
    %v786 = vpack.c.b16 %v783, %v782
    %v787 = vpack.c.b16 %v785, %v784
    %v791 = vsel %vm599, %v769, 0
    %793 = vmatpush.bf16.msra.mxu0 0
    %794 = vmatpush.bf16.msra.mxu0 0
    %795 = vmatpush.bf16.msra.mxu0 0
    %796 = vmatpush.bf16.msra.mxu0 0
    %797 = vmatpush.bf16.msra.mxu0 0
    %798 = vmatpush.bf16.msra.mxu0 0
    %799 = vmatpush.bf16.msra.mxu0 %v787
    %800 = vmatpush.bf16.msra.mxu0 %v786
    %801 = vmatmul.bf16.gmra.mxu0 %v791
    %v802 = vpop.f32.mrf.mxu0
    %v803 = vadd.f32 %v776, %v802
    %v804 = vpop.f32.mrf.mxu0
    %805 = vdwg.mxu0
    %v806 = vmax.f32 %v803, 0.0
    %v807 = vpack.c.bf16 %v806, %v806
    %v808 = vld [vmem:[%s15] sm:$0xf]
    %v809 = vld [vmem:[%s15 + $0x4] sm:$0xf]
    %v810 = vld [vmem:[%s15 + $0x8] sm:$0xf]
    %v811 = vld [vmem:[%s15 + $0xc] sm:$0xf]
    %v812 = vld [vmem:[%s16] sm:$0x1]
    %v814 = vperm.slane %v812, 0
    %v820 = vunpack.c.l.b16 %v808
    %v821 = vunpack.c.l.b16 %v809
    %v822 = vunpack.c.l.b16 %v810
    %v823 = vunpack.c.l.b16 %v811
    %v824 = vpack.c.b16 %v821, %v820
    %v825 = vpack.c.b16 %v823, %v822
    %v829 = vsel %vm599, %v807, 0
    %831 = vmatpush.bf16.msra.mxu0 0
    %832 = vmatpush.bf16.msra.mxu0 0
    %833 = vmatpush.bf16.msra.mxu0 0
    %834 = vmatpush.bf16.msra.mxu0 0
    %835 = vmatpush.bf16.msra.mxu0 0
    %836 = vmatpush.bf16.msra.mxu0 0
    %837 = vmatpush.bf16.msra.mxu0 %v825
    %838 = vmatpush.bf16.msra.mxu0 %v824
    %839 = vmatmul.bf16.gmra.mxu0 %v829
    %v840 = vpop.f32.mrf.mxu0
    %v841 = vadd.f32 %v814, %v840
    %v842 = vpop.f32.mrf.mxu0
    %843 = vdwg.mxu0
    %vm844 = vcmask 80896
    %v845 = vsel %vm844, %v841, -inf
    %846 = vmax.xlane.f32.xlu0 %v845
    %v847 = vpop.xlane.xlu0 %846
    %v848 = vsub.f32 %v841, %v847
    %v849 = vmul.f32 %v848, 1.442695
    %v850 = vpow.pop %v849
    %v851 = vsel %vm844, %v850, 0.0
    %852 = vadd.xlane.f32.xlu0 %v851
    %v853 = vpop.xlane.xlu0 %852
    %v854 = vlog2.pop %v853
    %v855 = vmul.f32 %v854, 0.6931472
    %v856 = vsub.f32 %v848, %v855
    %857 = vst.msk [vmem:[#allocation2] sm:$0xff] %vm844, %v856
    // Predicated region
    $region70: #{tpu_custom_call.1} parent=1 // pred_check
      _
    $region71: #{tpu_custom_call.1} parent=1 // pred_check_branch
      %859 = sbr.rel (0) target = $region73
    $region72: #{tpu_custom_call.1} parent=1 // pred_region
      %861 = vsyncadd [#allocation3], 0
      %s863 = sshll.u32 [#allocation2], 4
      %s864 = int_to_ptr.vmem [resolvable:$true] %s863
      %s865 = sshll.u32 %s17, 4
      %s866 = int_to_ptr.hbm [resolvable:$true] %s865
      %868 = dma.vmem_to_hbm [thread:$0]  %s864, 128, %s866, [#allocation3]
    $region73: #{tpu_custom_call.1} parent=1 // pred_fallthru
      _
    // Predicated region
    $region74: #{tpu_custom_call.1} parent=1 // pred_check
      _
    $region75: #{tpu_custom_call.1} parent=1 // pred_check_branch
      %870 = sbr.rel (0) target = $region77
    $region76: #{tpu_custom_call.1} parent=1 // pred_region
      %872 = dma.done [#allocation3], 128
    $region77: #{tpu_custom_call.1} parent=1 // pred_fallthru
      _
    %873 = vsyncpa [#allocation3], 1

</llo_original>
